<compile_context>
chip_gen: v6e
topology: v6e:2x2x1
jax: 0.10.0
libtpu: 0.0.40
codegen_flags: <defaults>
</compile_context>

<pallas_src>
import functools

import jax
import jax.numpy as jnp
from jax.experimental import pallas as pl
from jax.experimental.pallas import tpu as pltpu

LANE = 128
SUBLANE = 8


def qnetwork_kernel(x_ref, w1_ref, b1_ref, w2_ref, b2_ref, w3_ref, b3_ref, out_ref):
    # Fused 3-layer MLP on one batch tile: relu(x@W1+b1) -> relu(.@W2+b2) -> .@W3+b3
    x = x_ref[...]
    h1 = jnp.maximum(
        jnp.dot(x, w1_ref[...], preferred_element_type=jnp.float32) + b1_ref[...], 0.0)
    h2 = jnp.maximum(
        jnp.dot(h1, w2_ref[...], preferred_element_type=jnp.float32) + b2_ref[...], 0.0)
    out_ref[...] = (
        jnp.dot(h2, w3_ref[...], preferred_element_type=jnp.float32) + b3_ref[...])


def _round_up(x, m):
    return (x + m - 1) // m * m


def _cdiv(a, b):
    return -(-a // b)


def _vmem_limit_bytes(tb, state_size, h1_units, h2_units, action_size):
    # Everything in VMEM is lane-padded to 128; count double-buffered I/O tiles plus
    # the in-kernel f32 temporaries (x, h1, h2, out), then add params + slack.
    lane = lambda n: _round_up(n, LANE)
    row = 4 * (2 * lane(state_size) + 2 * lane(action_size)
               + lane(state_size) + lane(h1_units) + lane(h2_units) + lane(action_size))
    params_and_slack = 4 << 20
    # Clamp to 48 MiB so an oversized tile can never break v7x (64 MiB physical VMEM).
    return min(max(row * tb + params_and_slack, 8 << 20), 48 << 20)


@functools.partial(jax.jit, static_argnames=("tb_max", "min_pallas_batch"))
def qnetwork_forward(state, params, *, tb_max=4096, min_pallas_batch=65):
    """state: [B, state_size] f32. params: dict of (w1,b1,w2,b2,w3,b3)."""
    w1, b1, w2, b2, w3, b3 = (params[k] for k in ("w1", "b1", "w2", "b2", "w3", "b3"))
    B, state_size = state.shape
    action_size = w3.shape[1]
    h1_units, h2_units = w1.shape[1], w2.shape[1]

    # Small-batch fast path: custom-call launch + pipeline prologue exceeds the fused
    # XLA dot chain cost for online action selection.
    if B < min_pallas_batch:
        h1 = jnp.maximum(state @ w1 + b1, 0.0)
        h2 = jnp.maximum(h1 @ w2 + b2, 0.0)
        return h2 @ w3 + b3

    # Batch tiling: tb multiple of 8 (sublane), sized to hug B (minimal pad waste),
    # capped by tb_max (VMEM budget). Keep >= 2 grid steps at large B so the
    # "parallel" axis can shard across v7x's 2 TensorCores.
    n_tiles = _cdiv(B, tb_max)
    if B >= 1024:
        n_tiles = max(n_tiles, 2)
    tb = _round_up(_cdiv(B, n_tiles), SUBLANE)
    n_tiles = _cdiv(B, tb)
    b_pad = n_tiles * tb

    if b_pad != B:
        state_in = jnp.zeros((b_pad, state_size), state.dtype).at[:B, :].set(state)
    else:
        state_in = state
    grid = (n_tiles,)

    flops = 2 * b_pad * (state_size * h1_units + h1_units * h2_units
                         + h2_units * action_size)
    bytes_accessed = 4 * (
        b_pad * state_size + b_pad * action_size
        + w1.size + b1.size + w2.size + b2.size + w3.size + b3.size)

    const = lambda shape: pl.BlockSpec(shape, lambda i: (0, 0))  # VMEM-resident params
    out = pl.pallas_call(
        qnetwork_kernel,
        out_shape=jax.ShapeDtypeStruct((b_pad, action_size), jnp.float32),
        grid=grid,
        in_specs=[
            pl.BlockSpec((tb, state_size), lambda i: (i, 0)),
            const(w1.shape), const(b1.shape),
            const(w2.shape), const(b2.shape),
            const(w3.shape), const(b3.shape),
        ],
        out_specs=pl.BlockSpec((tb, action_size), lambda i: (i, 0)),
        compiler_params=pltpu.CompilerParams(
            dimension_semantics=("parallel",),
            vmem_limit_bytes=_vmem_limit_bytes(
                tb, state_size, h1_units, h2_units, action_size),
        ),
        cost_estimate=pl.CostEstimate(
            flops=flops, transcendentals=0, bytes_accessed=bytes_accessed),
    )(state_in, w1, b1, w2, b2, w3, b3)
    return out[:B] if b_pad != B else out


def init_params(key, state_size, action_size, layer1_units=64, layer2_units=64):
    """Deterministic init mimicking PyTorch nn.Linear: U(-1/sqrt(fan_in), 1/sqrt(fan_in))."""
    ks = jax.random.split(key, 6)

    def linear(kw, kb, fan_in, fan_out):
        bound = 1.0 / jnp.sqrt(jnp.float32(fan_in))
        w = jax.random.uniform(kw, (fan_in, fan_out), jnp.float32, -bound, bound)
        b = jax.random.uniform(kb, (1, fan_out), jnp.float32, -bound, bound)
        return w, b

    w1, b1 = linear(ks[0], ks[1], state_size, layer1_units)
    w2, b2 = linear(ks[2], ks[3], layer1_units, layer2_units)
    w3, b3 = linear(ks[4], ks[5], layer2_units, action_size)
    return {"w1": w1, "b1": b1, "w2": w2, "b2": b2, "w3": w3, "b3": b3}


def reference_forward(state, params):
    h1 = jnp.maximum(state @ params["w1"] + params["b1"], 0.0)
    h2 = jnp.maximum(h1 @ params["w2"] + params["b2"], 0.0)
    return h2 @ params["w3"] + params["b3"]


if __name__ == "__main__":
    # LunarLander-v2: state_size=8, action_size=4
    state_size, action_size = 8, 4

    key = jax.random.PRNGKey(0)
    k_params, k_state = jax.random.split(key)
    params = init_params(k_params, state_size, action_size)

    # Small batch: force the Pallas path (default threshold would take the XLA fast path).
    state = jax.random.normal(k_state, (32, state_size), dtype=jnp.float32)
    out = jax.block_until_ready(qnetwork_forward(state, params, min_pallas_batch=1))
    ref = reference_forward(state, params)
    assert out.shape == (32, action_size)
    assert jnp.allclose(out, ref, atol=1e-5, rtol=1e-5)

    # Replay-style batch, not a multiple of sublane/tile: Pallas path via default threshold.
    state2 = jax.random.normal(jax.random.PRNGKey(1), (300, state_size), dtype=jnp.float32)
    out2 = jax.block_until_ready(qnetwork_forward(state2, params))
    assert out2.shape == (300, action_size)
    assert jnp.allclose(out2, reference_forward(state2, params), atol=1e-5, rtol=1e-5)

    # Tiny batch exercises the XLA fast path (online action selection).
    state3 = jax.random.normal(jax.random.PRNGKey(2), (3, state_size), dtype=jnp.float32)
    out3 = jax.block_until_ready(qnetwork_forward(state3, params))
    assert out3.shape == (3, action_size)
    assert jnp.allclose(out3, reference_forward(state3, params), atol=1e-5, rtol=1e-5)

    print("KERNEL_OK")
</pallas_src>

<mosaic_0001>
module attributes {stable_mosaic.version = 11 : i64} {
  func.func @qnetwork_kernel(%arg0: i32, %arg1: memref<32x8xf32, #tpu.memory_space<vmem>>, %arg2: memref<8x64xf32, #tpu.memory_space<vmem>>, %arg3: memref<1x64xf32, #tpu.memory_space<vmem>>, %arg4: memref<64x64xf32, #tpu.memory_space<vmem>>, %arg5: memref<1x64xf32, #tpu.memory_space<vmem>>, %arg6: memref<64x4xf32, #tpu.memory_space<vmem>>, %arg7: memref<1x4xf32, #tpu.memory_space<vmem>>, %arg8: memref<32x4xf32, #tpu.memory_space<vmem>>) attributes {dimension_semantics = [#tpu.dimension_semantics<parallel>], iteration_bounds = array<i64: 1>, scalar_prefetch = 0 : i64, scratch_operands = 0 : i64, tpu.core_type = #tpu.core_type<tc>, window_params = [{transform_indices = @transform_0, window_bounds = array<i64: 32, 8>}, {pipeline_mode = #tpu.pipeline_mode<synchronous>, transform_indices = @transform_1, window_bounds = array<i64: 8, 64>}, {pipeline_mode = #tpu.pipeline_mode<synchronous>, transform_indices = @transform_2, window_bounds = array<i64: 1, 64>}, {pipeline_mode = #tpu.pipeline_mode<synchronous>, transform_indices = @transform_3, window_bounds = array<i64: 64, 64>}, {pipeline_mode = #tpu.pipeline_mode<synchronous>, transform_indices = @transform_4, window_bounds = array<i64: 1, 64>}, {pipeline_mode = #tpu.pipeline_mode<synchronous>, transform_indices = @transform_5, window_bounds = array<i64: 64, 4>}, {pipeline_mode = #tpu.pipeline_mode<synchronous>, transform_indices = @transform_6, window_bounds = array<i64: 1, 4>}, {transform_indices = @transform_7, window_bounds = array<i64: 32, 4>}]} {
    %c0 = arith.constant 0 : index
    %c0_0 = arith.constant 0 : index
    %0 = vector.load %arg1[%c0, %c0_0] : memref<32x8xf32, #tpu.memory_space<vmem>>, vector<32x8xf32>
    %c0_1 = arith.constant 0 : index
    %c0_2 = arith.constant 0 : index
    %1 = vector.load %arg2[%c0_1, %c0_2] : memref<8x64xf32, #tpu.memory_space<vmem>>, vector<8x64xf32>
    %cst = arith.constant dense<0.000000e+00> : vector<32x64xf32>
    %2 = tpu.matmul %0, %1, %cst {dimension_numbers = #tpu.dot_dimension_numbers<[1], [0], [0], [1], [0, 0, 1, 1], [], []>} : vector<32x8xf32>, vector<8x64xf32>, vector<32x64xf32> -> vector<32x64xf32>
    %c0_3 = arith.constant 0 : index
    %c0_4 = arith.constant 0 : index
    %3 = vector.load %arg3[%c0_3, %c0_4] : memref<1x64xf32, #tpu.memory_space<vmem>>, vector<1x64xf32>
    %4 = vector.broadcast %3 : vector<1x64xf32> to vector<32x64xf32>
    %5 = arith.addf %2, %4 : vector<32x64xf32>
    %cst_5 = arith.constant 0.000000e+00 : f32
    %6 = vector.broadcast %cst_5 : f32 to vector<32x64xf32>
    %7 = arith.maximumf %5, %6 : vector<32x64xf32>
    %c0_6 = arith.constant 0 : index
    %c0_7 = arith.constant 0 : index
    %8 = vector.load %arg4[%c0_6, %c0_7] : memref<64x64xf32, #tpu.memory_space<vmem>>, vector<64x64xf32>
    %cst_8 = arith.constant dense<0.000000e+00> : vector<32x64xf32>
    %9 = tpu.matmul %7, %8, %cst_8 {dimension_numbers = #tpu.dot_dimension_numbers<[1], [0], [0], [1], [0, 0, 1, 1], [], []>} : vector<32x64xf32>, vector<64x64xf32>, vector<32x64xf32> -> vector<32x64xf32>
    %c0_9 = arith.constant 0 : index
    %c0_10 = arith.constant 0 : index
    %10 = vector.load %arg5[%c0_9, %c0_10] : memref<1x64xf32, #tpu.memory_space<vmem>>, vector<1x64xf32>
    %11 = vector.broadcast %10 : vector<1x64xf32> to vector<32x64xf32>
    %12 = arith.addf %9, %11 : vector<32x64xf32>
    %cst_11 = arith.constant 0.000000e+00 : f32
    %13 = vector.broadcast %cst_11 : f32 to vector<32x64xf32>
    %14 = arith.maximumf %12, %13 : vector<32x64xf32>
    %c0_12 = arith.constant 0 : index
    %c0_13 = arith.constant 0 : index
    %15 = vector.load %arg6[%c0_12, %c0_13] : memref<64x4xf32, #tpu.memory_space<vmem>>, vector<64x4xf32>
    %cst_14 = arith.constant dense<0.000000e+00> : vector<32x4xf32>
    %16 = tpu.matmul %14, %15, %cst_14 {dimension_numbers = #tpu.dot_dimension_numbers<[1], [0], [0], [1], [0, 0, 1, 1], [], []>} : vector<32x64xf32>, vector<64x4xf32>, vector<32x4xf32> -> vector<32x4xf32>
    %c0_15 = arith.constant 0 : index
    %c0_16 = arith.constant 0 : index
    %17 = vector.load %arg7[%c0_15, %c0_16] : memref<1x4xf32, #tpu.memory_space<vmem>>, vector<1x4xf32>
    %18 = vector.broadcast %17 : vector<1x4xf32> to vector<32x4xf32>
    %19 = arith.addf %16, %18 : vector<32x4xf32>
    %c0_17 = arith.constant 0 : index
    %c0_18 = arith.constant 0 : index
    %20 = vector.load %arg8[%c0_17, %c0_18] : memref<32x4xf32, #tpu.memory_space<vmem>>, vector<32x4xf32>
    tpu.vector_store %arg8[%c0_17, %c0_18], %19 {strides = array<i32>} : memref<32x4xf32, #tpu.memory_space<vmem>>, vector<32x4xf32>,
    return
  }
  func.func @transform_0(%arg0: i32) -> (i32, i32) {
    %c0_i32 = arith.constant 0 : i32
    %c0_i32_0 = arith.constant 0 : i32
    return %arg0, %c0_i32 : i32, i32
  }
  func.func @transform_1(%arg0: i32) -> (i32, i32) {
    %c0_i32 = arith.constant 0 : i32
    %c0_i32_0 = arith.constant 0 : i32
    %c0_i32_1 = arith.constant 0 : i32
    return %c0_i32, %c0_i32_0 : i32, i32
  }
  func.func @transform_2(%arg0: i32) -> (i32, i32) {
    %c0_i32 = arith.constant 0 : i32
    %c0_i32_0 = arith.constant 0 : i32
    %c0_i32_1 = arith.constant 0 : i32
    return %c0_i32, %c0_i32_0 : i32, i32
  }
  func.func @transform_3(%arg0: i32) -> (i32, i32) {
    %c0_i32 = arith.constant 0 : i32
    %c0_i32_0 = arith.constant 0 : i32
    %c0_i32_1 = arith.constant 0 : i32
    return %c0_i32, %c0_i32_0 : i32, i32
  }
  func.func @transform_4(%arg0: i32) -> (i32, i32) {
    %c0_i32 = arith.constant 0 : i32
    %c0_i32_0 = arith.constant 0 : i32
    %c0_i32_1 = arith.constant 0 : i32
    return %c0_i32, %c0_i32_0 : i32, i32
  }
  func.func @transform_5(%arg0: i32) -> (i32, i32) {
    %c0_i32 = arith.constant 0 : i32
    %c0_i32_0 = arith.constant 0 : i32
    %c0_i32_1 = arith.constant 0 : i32
    return %c0_i32, %c0_i32_0 : i32, i32
  }
  func.func @transform_6(%arg0: i32) -> (i32, i32) {
    %c0_i32 = arith.constant 0 : i32
    %c0_i32_0 = arith.constant 0 : i32
    %c0_i32_1 = arith.constant 0 : i32
    return %c0_i32, %c0_i32_0 : i32, i32
  }
  func.func @transform_7(%arg0: i32) -> (i32, i32) {
    %c0_i32 = arith.constant 0 : i32
    %c0_i32_0 = arith.constant 0 : i32
    return %arg0, %c0_i32 : i32, i32
  }
}

</mosaic_0001>

<llo_original>
// kernel: qnetwork_forward.1
$region0: #{qnetwork_forward.1}
  #allocation0 [shape = 'u32[]', space=smem, size = 0x4, offset = 0x4, fixed_abs, tag = 'smem constant byte address 0x4 - core index']
  #allocation1 [shape = 'u32[144,128]{1,0:T(1,128)}', space=vmem, size = 0x12000, scoped, tag = 'internal scratch']
  %s0 = inlined_call_operand.vmem [shape: f32[32,8], index: 0, kind: input, shape index: {}]
  %s1 = inlined_call_operand.vmem [shape: f32[8,64], index: 1, kind: input, shape index: {}]
  %s2 = inlined_call_operand.vmem [shape: f32[1,64], index: 2, kind: input, shape index: {}]
  %s3 = inlined_call_operand.vmem [shape: f32[64,64], index: 3, kind: input, shape index: {}]
  %s4 = inlined_call_operand.vmem [shape: f32[1,64], index: 4, kind: input, shape index: {}]
  %s5 = inlined_call_operand.vmem [shape: f32[64,4], index: 5, kind: input, shape index: {}]
  %s6 = inlined_call_operand.vmem [shape: f32[1,4], index: 6, kind: input, shape index: {}]
  %s7 = inlined_call_operand.vmem [shape: f32[32,4], index: 7, kind: output, shape index: {}]
  %s8 = sld [smem:[#allocation0]]
  $region38: #{qnetwork_forward.1} parent=0
    _
  %s10 = ssub.s32 1, %s8
  %s11 = scalar_select 0, %s10, %s8
  // Predicated region
  $region2: #{qnetwork_forward.1} parent=0 // pred_check
    _
  $region3: #{qnetwork_forward.1} parent=0 // pred_check_branch
    %13 = sbr.rel (0) target = $region5
  $region4: #{qnetwork_forward.1} parent=0 // pred_region
    _
  $region5: #{qnetwork_forward.1} parent=0 // pred_fallthru
    _
  // Predicated region
  $region6: #{qnetwork_forward.1} parent=0 // pred_check
    _
  $region7: #{qnetwork_forward.1} parent=0 // pred_check_branch
    %15 = sbr.rel (0) target = $region9
  $region8: #{qnetwork_forward.1} parent=0 // pred_region
    _
  $region9: #{qnetwork_forward.1} parent=0 // pred_fallthru
    _
  // Predicated region
  $region10: #{qnetwork_forward.1} parent=0 // pred_check
    _
  $region11: #{qnetwork_forward.1} parent=0 // pred_check_branch
    %17 = sbr.rel (0) target = $region13
  $region12: #{qnetwork_forward.1} parent=0 // pred_region
    _
  $region13: #{qnetwork_forward.1} parent=0 // pred_fallthru
    _
  // Predicated region
  $region14: #{qnetwork_forward.1} parent=0 // pred_check
    _
  $region15: #{qnetwork_forward.1} parent=0 // pred_check_branch
    %19 = sbr.rel (0) target = $region17
  $region16: #{qnetwork_forward.1} parent=0 // pred_region
    _
  $region17: #{qnetwork_forward.1} parent=0 // pred_fallthru
    _
  // Predicated region
  $region18: #{qnetwork_forward.1} parent=0 // pred_check
    _
  $region19: #{qnetwork_forward.1} parent=0 // pred_check_branch
    %21 = sbr.rel (0) target = $region21
  $region20: #{qnetwork_forward.1} parent=0 // pred_region
    _
  $region21: #{qnetwork_forward.1} parent=0 // pred_fallthru
    _
  // Predicated region
  $region22: #{qnetwork_forward.1} parent=0 // pred_check
    _
  $region23: #{qnetwork_forward.1} parent=0 // pred_check_branch
    %23 = sbr.rel (0) target = $region25
  $region24: #{qnetwork_forward.1} parent=0 // pred_region
    _
  $region25: #{qnetwork_forward.1} parent=0 // pred_fallthru
    _
  // Predicated region
  $region26: #{qnetwork_forward.1} parent=0 // pred_check
    _
  $region27: #{qnetwork_forward.1} parent=0 // pred_check_branch
    %25 = sbr.rel (0) target = $region29
  $region28: #{qnetwork_forward.1} parent=0 // pred_region
    _
  $region29: #{qnetwork_forward.1} parent=0 // pred_fallthru
    _
  %v26 = vld [vmem:[%s0] sm:$0xff]
  %v27 = vld [vmem:[%s0 + $0x8] sm:$0xff]
  %v28 = vld [vmem:[%s0 + $0x10] sm:$0xff]
  %v29 = vld [vmem:[%s0 + $0x18] sm:$0xff]
  %v30 = vld [vmem:[%s1] sm:$0xff]
  %v31 = vld [vmem:[%s2] sm:$0x1]
  %v33 = vlaneseq
  %v34 = vshrl.u32 %v33, 7
  %v35 = vsub.s32 0, %v34
  %v36 = vrot.slane %v31, %v35
  %vm38 = vcmask 64512
  %v40 = vsel %vm38, %v26, 0
  %v43 = vsel %vm38, %v27, 0
  %v46 = vsel %vm38, %v28, 0
  %v49 = vsel %vm38, %v29, 0
  %51 = vmatprep.subr.mxu0 0.0
  %52 = vmatpush1.msra.mxu0 0.0
  %53 = vmatprep.subr.mxu0 0.0
  %54 = vmatpush1.msra.mxu0 0.0
  %55 = vmatprep.subr.mxu0 0.0
  %56 = vmatpush1.msra.mxu0 0.0
  %57 = vmatprep.subr.mxu0 0.0
  %58 = vmatpush1.msra.mxu0 0.0
  %59 = vmatprep.subr.mxu0 0.0
  %60 = vmatpush1.msra.mxu0 0.0
  %61 = vmatprep.subr.mxu0 0.0
  %62 = vmatpush1.msra.mxu0 0.0
  %63 = vmatprep.subr.mxu0 0.0
  %64 = vmatpush1.msra.mxu0 0.0
  %65 = vmatprep.subr.mxu0 0.0
  %66 = vmatpush1.msra.mxu0 0.0
  %67 = vmatprep.subr.mxu0 0.0
  %68 = vmatpush1.msra.mxu0 0.0
  %69 = vmatprep.subr.mxu0 0.0
  %70 = vmatpush1.msra.mxu0 0.0
  %71 = vmatprep.subr.mxu0 0.0
  %72 = vmatpush1.msra.mxu0 0.0
  %73 = vmatprep.subr.mxu0 0.0
  %74 = vmatpush1.msra.mxu0 0.0
  %75 = vmatprep.subr.mxu0 0.0
  %76 = vmatpush1.msra.mxu0 0.0
  %77 = vmatprep.subr.mxu0 0.0
  %78 = vmatpush1.msra.mxu0 0.0
  %79 = vmatprep.subr.mxu0 0.0
  %80 = vmatpush1.msra.mxu0 0.0
  %81 = vmatprep.subr.mxu0 0.0
  %82 = vmatpush1.msra.mxu0 %v30
  %83 = vmatprep.subr.mxu0 0.0
  %84 = vmatpush2.msra.mxu0 0.0
  %85 = vmatprep.subr.mxu0 0.0
  %86 = vmatpush2.msra.mxu0 0.0
  %87 = vmatprep.subr.mxu0 0.0
  %88 = vmatpush2.msra.mxu0 0.0
  %89 = vmatprep.subr.mxu0 0.0
  %90 = vmatpush2.msra.mxu0 0.0
  %91 = vmatprep.subr.mxu0 0.0
  %92 = vmatpush2.msra.mxu0 0.0
  %93 = vmatprep.subr.mxu0 0.0
  %94 = vmatpush2.msra.mxu0 0.0
  %95 = vmatprep.subr.mxu0 0.0
  %96 = vmatpush2.msra.mxu0 0.0
  %97 = vmatprep.subr.mxu0 0.0
  %98 = vmatpush2.msra.mxu0 0.0
  %99 = vmatprep.subr.mxu0 0.0
  %100 = vmatpush2.msra.mxu0 0.0
  %101 = vmatprep.subr.mxu0 0.0
  %102 = vmatpush2.msra.mxu0 0.0
  %103 = vmatprep.subr.mxu0 0.0
  %104 = vmatpush2.msra.mxu0 0.0
  %105 = vmatprep.subr.mxu0 0.0
  %106 = vmatpush2.msra.mxu0 0.0
  %107 = vmatprep.subr.mxu0 0.0
  %108 = vmatpush2.msra.mxu0 0.0
  %109 = vmatprep.subr.mxu0 0.0
  %110 = vmatpush2.msra.mxu0 0.0
  %111 = vmatprep.subr.mxu0 0.0
  %112 = vmatpush2.msra.mxu0 0.0
  %113 = vmatprep.subr.mxu0 0.0
  %114 = vmatpush2.msra.mxu0 0.0
  %115 = vmatprep.mubr.f32.mxu0 0.0
  %116 = vmatmul.mubr.f32.gmra.mxu0 %v40
  %v117 = vpop.f32.mrf.mxu0
  %v118 = vadd.f32 %v36, %v117
  %v119 = vpop.f32.mrf.mxu0
  %120 = vmatprep.mubr.f32.mxu0 0.0
  %121 = vmatmul.mubr.f32.gmra.mxu0 %v43
  %v122 = vpop.f32.mrf.mxu0
  %v123 = vadd.f32 %v36, %v122
  %v124 = vpop.f32.mrf.mxu0
  %125 = vmatprep.mubr.f32.mxu0 0.0
  %126 = vmatmul.mubr.f32.gmra.mxu0 %v46
  %v127 = vpop.f32.mrf.mxu0
  %v128 = vadd.f32 %v36, %v127
  %v129 = vpop.f32.mrf.mxu0
  %130 = vmatprep.mubr.f32.mxu0 0.0
  %131 = vmatmul.mubr.f32.gmra.mxu0 %v49
  %v132 = vpop.f32.mrf.mxu0
  %v133 = vadd.f32 %v36, %v132
  %v134 = vpop.f32.mrf.mxu0
  %135 = vdwg.mxu0
  %v136 = vmax.f32 %v118, 0.0
  %v137 = vmax.f32 %v123, 0.0
  %v138 = vmax.f32 %v128, 0.0
  %v139 = vmax.f32 %v133, 0.0
  %v140 = vld [vmem:[%s3] sm:$0xff]
  %v141 = vld [vmem:[%s3 + $0x8] sm:$0xff]
  %v142 = vld [vmem:[%s3 + $0x10] sm:$0xff]
  %v143 = vld [vmem:[%s3 + $0x18] sm:$0xff]
  %v144 = vld [vmem:[%s3 + $0x20] sm:$0xff]
  %v145 = vld [vmem:[%s3 + $0x28] sm:$0xff]
  %v146 = vld [vmem:[%s3 + $0x30] sm:$0xff]
  %v147 = vld [vmem:[%s3 + $0x38] sm:$0xff]
  %v148 = vld [vmem:[%s4] sm:$0x1]
  %v150 = vlaneseq
  %v151 = vshrl.u32 %v150, 7
  %v152 = vsub.s32 0, %v151
  %v153 = vrot.slane %v148, %v152
  %vm155 = vcmask 523264
  %v157 = vsel %vm155, %v136, 0
  %v160 = vsel %vm155, %v137, 0
  %v163 = vsel %vm155, %v138, 0
  %v166 = vsel %vm155, %v139, 0
  %168 = vmatprep.subr.mxu0 0.0
  %169 = vmatpush1.msra.mxu0 0.0
  %170 = vmatprep.subr.mxu0 0.0
  %171 = vmatpush1.msra.mxu0 0.0
  %172 = vmatprep.subr.mxu0 0.0
  %173 = vmatpush1.msra.mxu0 0.0
  %174 = vmatprep.subr.mxu0 0.0
  %175 = vmatpush1.msra.mxu0 0.0
  %176 = vmatprep.subr.mxu0 0.0
  %177 = vmatpush1.msra.mxu0 0.0
  %178 = vmatprep.subr.mxu0 0.0
  %179 = vmatpush1.msra.mxu0 0.0
  %180 = vmatprep.subr.mxu0 0.0
  %181 = vmatpush1.msra.mxu0 0.0
  %182 = vmatprep.subr.mxu0 0.0
  %183 = vmatpush1.msra.mxu0 0.0
  %184 = vmatprep.subr.mxu0 0.0
  %185 = vmatpush1.msra.mxu0 %v147
  %186 = vmatprep.subr.mxu0 0.0
  %187 = vmatpush1.msra.mxu0 %v146
  %188 = vmatprep.subr.mxu0 0.0
  %189 = vmatpush1.msra.mxu0 %v145
  %190 = vmatprep.subr.mxu0 0.0
  %191 = vmatpush1.msra.mxu0 %v144
  %192 = vmatprep.subr.mxu0 0.0
  %193 = vmatpush1.msra.mxu0 %v143
  %194 = vmatprep.subr.mxu0 0.0
  %195 = vmatpush1.msra.mxu0 %v142
  %196 = vmatprep.subr.mxu0 0.0
  %197 = vmatpush1.msra.mxu0 %v141
  %198 = vmatprep.subr.mxu0 0.0
  %199 = vmatpush1.msra.mxu0 %v140
  %200 = vmatprep.subr.mxu0 0.0
  %201 = vmatpush2.msra.mxu0 0.0
  %202 = vmatprep.subr.mxu0 0.0
  %203 = vmatpush2.msra.mxu0 0.0
  %204 = vmatprep.subr.mxu0 0.0
  %205 = vmatpush2.msra.mxu0 0.0
  %206 = vmatprep.subr.mxu0 0.0
  %207 = vmatpush2.msra.mxu0 0.0
  %208 = vmatprep.subr.mxu0 0.0
  %209 = vmatpush2.msra.mxu0 0.0
  %210 = vmatprep.subr.mxu0 0.0
  %211 = vmatpush2.msra.mxu0 0.0
  %212 = vmatprep.subr.mxu0 0.0
  %213 = vmatpush2.msra.mxu0 0.0
  %214 = vmatprep.subr.mxu0 0.0
  %215 = vmatpush2.msra.mxu0 0.0
  %216 = vmatprep.subr.mxu0 0.0
  %217 = vmatpush2.msra.mxu0 0.0
  %218 = vmatprep.subr.mxu0 0.0
  %219 = vmatpush2.msra.mxu0 0.0
  %220 = vmatprep.subr.mxu0 0.0
  %221 = vmatpush2.msra.mxu0 0.0
  %222 = vmatprep.subr.mxu0 0.0
  %223 = vmatpush2.msra.mxu0 0.0
  %224 = vmatprep.subr.mxu0 0.0
  %225 = vmatpush2.msra.mxu0 0.0
  %226 = vmatprep.subr.mxu0 0.0
  %227 = vmatpush2.msra.mxu0 0.0
  %228 = vmatprep.subr.mxu0 0.0
  %229 = vmatpush2.msra.mxu0 0.0
  %230 = vmatprep.subr.mxu0 0.0
  %231 = vmatpush2.msra.mxu0 0.0
  %232 = vmatprep.mubr.f32.mxu0 0.0
  %233 = vmatmul.mubr.f32.gmra.mxu0 %v157
  %v234 = vpop.f32.mrf.mxu0
  %v235 = vadd.f32 %v153, %v234
  %v236 = vpop.f32.mrf.mxu0
  %237 = vmatprep.mubr.f32.mxu0 0.0
  %238 = vmatmul.mubr.f32.gmra.mxu0 %v160
  %v239 = vpop.f32.mrf.mxu0
  %v240 = vadd.f32 %v153, %v239
  %v241 = vpop.f32.mrf.mxu0
  %242 = vmatprep.mubr.f32.mxu0 0.0
  %243 = vmatmul.mubr.f32.gmra.mxu0 %v163
  %v244 = vpop.f32.mrf.mxu0
  %v245 = vadd.f32 %v153, %v244
  %v246 = vpop.f32.mrf.mxu0
  %247 = vmatprep.mubr.f32.mxu0 0.0
  %248 = vmatmul.mubr.f32.gmra.mxu0 %v166
  %v249 = vpop.f32.mrf.mxu0
  %v250 = vadd.f32 %v153, %v249
  %v251 = vpop.f32.mrf.mxu0
  %252 = vdwg.mxu0
  %v253 = vmax.f32 %v235, 0.0
  %v254 = vmax.f32 %v240, 0.0
  %v255 = vmax.f32 %v245, 0.0
  %v256 = vmax.f32 %v250, 0.0
  %v257 = vld [vmem:[%s5] sm:$0xff]
  %v258 = vld [vmem:[%s5 + $0x8] sm:$0xff]
  %v259 = vld [vmem:[%s5 + $0x10] sm:$0xff]
  %v260 = vld [vmem:[%s5 + $0x18] sm:$0xff]
  %v261 = vld [vmem:[%s5 + $0x20] sm:$0xff]
  %v262 = vld [vmem:[%s5 + $0x28] sm:$0xff]
  %v263 = vld [vmem:[%s5 + $0x30] sm:$0xff]
  %v264 = vld [vmem:[%s5 + $0x38] sm:$0xff]
  %v265 = vld [vmem:[%s6] sm:$0x1]
  %v267 = vlaneseq
  %v268 = vshrl.u32 %v267, 7
  %v269 = vsub.s32 0, %v268
  %v270 = vrot.slane %v265, %v269
  %v273 = vsel %vm155, %v253, 0
  %v276 = vsel %vm155, %v254, 0
  %v279 = vsel %vm155, %v255, 0
  %v282 = vsel %vm155, %v256, 0
  %284 = vmatprep.subr.mxu0 0.0
  %285 = vmatpush1.msra.mxu0 0.0
  %286 = vmatprep.subr.mxu0 0.0
  %287 = vmatpush1.msra.mxu0 0.0
  %288 = vmatprep.subr.mxu0 0.0
  %289 = vmatpush1.msra.mxu0 0.0
  %290 = vmatprep.subr.mxu0 0.0
  %291 = vmatpush1.msra.mxu0 0.0
  %292 = vmatprep.subr.mxu0 0.0
  %293 = vmatpush1.msra.mxu0 0.0
  %294 = vmatprep.subr.mxu0 0.0
  %295 = vmatpush1.msra.mxu0 0.0
  %296 = vmatprep.subr.mxu0 0.0
  %297 = vmatpush1.msra.mxu0 0.0
  %298 = vmatprep.subr.mxu0 0.0
  %299 = vmatpush1.msra.mxu0 0.0
  %300 = vmatprep.subr.mxu0 0.0
  %301 = vmatpush1.msra.mxu0 %v264
  %302 = vmatprep.subr.mxu0 0.0
  %303 = vmatpush1.msra.mxu0 %v263
  %304 = vmatprep.subr.mxu0 0.0
  %305 = vmatpush1.msra.mxu0 %v262
  %306 = vmatprep.subr.mxu0 0.0
  %307 = vmatpush1.msra.mxu0 %v261
  %308 = vmatprep.subr.mxu0 0.0
  %309 = vmatpush1.msra.mxu0 %v260
  %310 = vmatprep.subr.mxu0 0.0
  %311 = vmatpush1.msra.mxu0 %v259
  %312 = vmatprep.subr.mxu0 0.0
  %313 = vmatpush1.msra.mxu0 %v258
  %314 = vmatprep.subr.mxu0 0.0
  %315 = vmatpush1.msra.mxu0 %v257
  %316 = vmatprep.subr.mxu0 0.0
  %317 = vmatpush2.msra.mxu0 0.0
  %318 = vmatprep.subr.mxu0 0.0
  %319 = vmatpush2.msra.mxu0 0.0
  %320 = vmatprep.subr.mxu0 0.0
  %321 = vmatpush2.msra.mxu0 0.0
  %322 = vmatprep.subr.mxu0 0.0
  %323 = vmatpush2.msra.mxu0 0.0
  %324 = vmatprep.subr.mxu0 0.0
  %325 = vmatpush2.msra.mxu0 0.0
  %326 = vmatprep.subr.mxu0 0.0
  %327 = vmatpush2.msra.mxu0 0.0
  %328 = vmatprep.subr.mxu0 0.0
  %329 = vmatpush2.msra.mxu0 0.0
  %330 = vmatprep.subr.mxu0 0.0
  %331 = vmatpush2.msra.mxu0 0.0
  %332 = vmatprep.subr.mxu0 0.0
  %333 = vmatpush2.msra.mxu0 0.0
  %334 = vmatprep.subr.mxu0 0.0
  %335 = vmatpush2.msra.mxu0 0.0
  %336 = vmatprep.subr.mxu0 0.0
  %337 = vmatpush2.msra.mxu0 0.0
  %338 = vmatprep.subr.mxu0 0.0
  %339 = vmatpush2.msra.mxu0 0.0
  %340 = vmatprep.subr.mxu0 0.0
  %341 = vmatpush2.msra.mxu0 0.0
  %342 = vmatprep.subr.mxu0 0.0
  %343 = vmatpush2.msra.mxu0 0.0
  %344 = vmatprep.subr.mxu0 0.0
  %345 = vmatpush2.msra.mxu0 0.0
  %346 = vmatprep.subr.mxu0 0.0
  %347 = vmatpush2.msra.mxu0 0.0
  %348 = vmatprep.mubr.f32.mxu0 0.0
  %349 = vmatmul.mubr.f32.gmra.mxu0 %v273
  %v350 = vpop.f32.mrf.mxu0
  %v351 = vadd.f32 %v270, %v350
  %v352 = vpop.f32.mrf.mxu0
  %353 = vmatprep.mubr.f32.mxu0 0.0
  %354 = vmatmul.mubr.f32.gmra.mxu0 %v276
  %v355 = vpop.f32.mrf.mxu0
  %v356 = vadd.f32 %v270, %v355
  %v357 = vpop.f32.mrf.mxu0
  %358 = vmatprep.mubr.f32.mxu0 0.0
  %359 = vmatmul.mubr.f32.gmra.mxu0 %v279
  %v360 = vpop.f32.mrf.mxu0
  %v361 = vadd.f32 %v270, %v360
  %v362 = vpop.f32.mrf.mxu0
  %363 = vmatprep.mubr.f32.mxu0 0.0
  %364 = vmatmul.mubr.f32.gmra.mxu0 %v282
  %v365 = vpop.f32.mrf.mxu0
  %v366 = vadd.f32 %v270, %v365
  %v367 = vpop.f32.mrf.mxu0
  %368 = vdwg.mxu0
  %vm369 = vcmask 31744
  %370 = vst.msk [vmem:[%s7] sm:$0xff] %vm369, %v351
  %371 = vst.msk [vmem:[%s7 + $0x8] sm:$0xff] %vm369, %v356
  %372 = vst.msk [vmem:[%s7 + $0x10] sm:$0xff] %vm369, %v361
  %373 = vst.msk [vmem:[%s7 + $0x18] sm:$0xff] %vm369, %v366
  // Predicated region
  $region30: #{qnetwork_forward.1} parent=0 // pred_check
    _
  $region31: #{qnetwork_forward.1} parent=0 // pred_check_branch
    %375 = sbr.rel (0) target = $region33
  $region32: #{qnetwork_forward.1} parent=0 // pred_region
    _
  $region33: #{qnetwork_forward.1} parent=0 // pred_fallthru
    _
  // Predicated region
  $region34: #{qnetwork_forward.1} parent=0 // pred_check
    _
  $region35: #{qnetwork_forward.1} parent=0 // pred_check_branch
    %377 = sbr.rel (0) target = $region37
  $region36: #{qnetwork_forward.1} parent=0 // pred_region
    _
  $region37: #{qnetwork_forward.1} parent=0 // pred_fallthru
    _

</llo_original>
